<compile_context>
chip_gen: v6e
topology: v6e:2x2x1
jax: 0.10.0
libtpu: 0.0.40
codegen_flags: <defaults>
</compile_context>

<pallas_src>
import functools
from math import sqrt

import jax
import jax.numpy as jnp
from jax.experimental import pallas as pl
from jax.experimental.pallas import tpu as pltpu


def mapping_kernel(z_ref, w_ref, b_ref, ones_ref, out_ref, *, depth):
    # z_ref:    (TB, F)        PACK samples packed along the lane axis, F = PACK*z_dim
    # w_ref:    (depth, F, F)  block-diagonal, pre-transposed, pre-scaled weights
    # b_ref:    (depth, F)     bias * lr_mul, tiled PACK times along lanes
    # ones_ref: (F, F)         block-diagonal ones(z_dim, z_dim) (segmented reduce)
    # out_ref:  (TB, F)
    x = z_ref[...].astype(jnp.float32)

    # F.normalize(z, dim=1) == x * rsqrt(max(||x||^2, 1e-24))
    # Segmented (per-sample) sum-of-squares via a block-diag ones matmul on the
    # MXU; broadcasts the per-sample norm across that sample's 32 lanes.
    sq = jnp.dot(x * x, ones_ref[...], preferred_element_type=jnp.float32)
    x = x * jax.lax.rsqrt(jnp.maximum(sq, 1e-24))

    b_all = b_ref[...].astype(jnp.float32)

    # depth is a small static constant -> fully unrolled Python loop.
    for i in range(depth):
        out = jnp.dot(x, w_ref[i].astype(jnp.float32),
                      preferred_element_type=jnp.float32)
        out = out + b_all[i][None, :]
        x = jnp.where(out >= 0, out, 0.2 * out)       # LeakyReLU(0.2)

    out_ref[...] = x.astype(out_ref.dtype)


def mapping_network(z, weights, biases, *, lr_mul=0.01, tile_rows=256):
    """z: (B, z_dim); weights: (depth, w_dim, in_dim) in PyTorch nn.Linear layout
    (stacked); biases: (depth, w_dim)."""
    B, z_dim = z.shape
    depth, w_dim, in_dim0 = weights.shape
    assert in_dim0 == z_dim and z_dim == w_dim, \
        "stacked-weight layout assumes z_dim == w_dim"

    # ---- one-time constant prep (all folded into weight/bias constants) ----
    # equalized-LR scale per layer, folded into the pre-transposed weights.
    scales = jnp.asarray(
        [(1.0 / sqrt(z_dim if i == 0 else w_dim)) * lr_mul for i in range(depth)],
        dtype=jnp.float32)[:, None, None]
    w_t = jnp.transpose(weights.astype(jnp.float32), (0, 2, 1)) * scales  # (d, in, out)
    b_eff = biases.astype(jnp.float32) * lr_mul                           # (d, out)

    # Lane-dense packing: PACK samples side-by-side along the 128-lane axis.
    pack = 128 // w_dim if (w_dim <= 128 and 128 % w_dim == 0) else 1
    feat = pack * w_dim

    if pack > 1:
        eye = jnp.eye(pack, dtype=jnp.float32)
        # block-diag: pack copies of the scaled, transposed W on the diagonal.
        w_bd = jnp.einsum('pq,dio->dpiqo', eye, w_t).reshape(depth, feat, feat)
        b_bd = jnp.tile(b_eff, (1, pack))                                  # (d, feat)
        ones_bd = jnp.kron(eye, jnp.ones((z_dim, z_dim), jnp.float32))     # (feat, feat)
    else:
        w_bd, b_bd = w_t, b_eff
        ones_bd = jnp.ones((z_dim, z_dim), jnp.float32)

    # ---- batch packing / padding and grid choice ----
    rows = -(-B // pack)                                  # packed rows (ceil)
    tb = tile_rows if rows > tile_rows else max(8, ((rows + 7) // 8) * 8)
    rows_pad = ((rows + tb - 1) // tb) * tb
    grid = rows_pad // tb

    z_pad = jnp.zeros((rows_pad * pack, z_dim), jnp.float32).at[:B].set(
        z.astype(jnp.float32))
    z_packed = z_pad.reshape(rows_pad, feat)

    kernel = functools.partial(mapping_kernel, depth=depth)

    out_packed = pl.pallas_call(
        kernel,
        out_shape=jax.ShapeDtypeStruct((rows_pad, feat), z.dtype),
        grid=(grid,),
        in_specs=[
            pl.BlockSpec((tb, feat), lambda i: (i, 0)),            # batch-tiled z
            pl.BlockSpec((depth, feat, feat), lambda i: (0, 0, 0)),  # weights resident
            pl.BlockSpec((depth, feat), lambda i: (0, 0)),           # biases resident
            pl.BlockSpec((feat, feat), lambda i: (0, 0)),            # norm helper resident
        ],
        out_specs=pl.BlockSpec((tb, feat), lambda i: (i, 0)),
        compiler_params=pltpu.CompilerParams(
            dimension_semantics=("parallel",)),    # both TCs on v7x; no-op on v5e/v6e
    )(z_packed, w_bd, b_bd, ones_bd)

    # Unpack: (rows_pad, pack*w_dim) -> (rows_pad*pack, w_dim) -> strip padding.
    return out_packed.reshape(rows_pad * pack, w_dim)[:B]


def reference_mapping(z, weights, biases, *, lr_mul=0.01):
    """Pure-JAX reference matching the PyTorch forward."""
    x = z.astype(jnp.float32)
    norm = jnp.maximum(jnp.sqrt(jnp.sum(x * x, axis=1, keepdims=True)), 1e-12)
    x = x / norm
    depth, w_dim, _ = weights.shape
    for i in range(depth):
        in_dim = z.shape[1] if i == 0 else w_dim
        scale = (1.0 / sqrt(in_dim)) * lr_mul
        out = x @ (weights[i] * scale).T + biases[i] * lr_mul
        x = jnp.where(out >= 0, out, 0.2 * out)
    return x


if __name__ == "__main__":
    # Small shapes consistent with the module: z_dim = w_dim = 32, depth = 8.
    Z_DIM, W_DIM, DEPTH, LR_MUL = 32, 32, 8, 0.01

    key = jax.random.PRNGKey(0)
    kz, kw, kz2 = jax.random.split(key, 3)

    # EqualLinear init: weight = randn(out, in) / lr_mul ; bias = 0 (bias_init=0).
    weights = jax.random.normal(kw, (DEPTH, W_DIM, Z_DIM), dtype=jnp.float32) / LR_MUL
    biases = jnp.zeros((DEPTH, W_DIM), dtype=jnp.float32)

    # Primary small test (B=8).
    z = jax.random.normal(kz, (8, Z_DIM), dtype=jnp.float32)
    w_out = jax.block_until_ready(mapping_network(z, weights, biases, lr_mul=LR_MUL))
    w_ref = reference_mapping(z, weights, biases, lr_mul=LR_MUL)
    assert w_out.shape == (8, W_DIM)
    assert jnp.allclose(w_out, w_ref, atol=1e-5, rtol=1e-5), (
        float(jnp.max(jnp.abs(w_out - w_ref))))

    # Padding path: batch not a multiple of the lane-packing factor.
    z5 = jax.random.normal(kz2, (5, Z_DIM), dtype=jnp.float32)
    w5 = jax.block_until_ready(mapping_network(z5, weights, biases, lr_mul=LR_MUL))
    assert jnp.allclose(w5, reference_mapping(z5, weights, biases, lr_mul=LR_MUL),
                        atol=1e-5, rtol=1e-5)

    # Multi-step grid path (rows > tile_rows), exercising resident weights +
    # parallel batch axis.
    zb = jax.random.normal(kz2, (1030, Z_DIM), dtype=jnp.float32)
    wb = jax.block_until_ready(mapping_network(zb, weights, biases, lr_mul=LR_MUL))
    assert jnp.allclose(wb, reference_mapping(zb, weights, biases, lr_mul=LR_MUL),
                        atol=1e-5, rtol=1e-5)

    print("KERNEL_OK")
</pallas_src>

<mosaic_0001>
module attributes {stable_mosaic.version = 11 : i64} {
  func.func @mapping_kernel(%arg0: i32, %arg1: memref<8x128xf32, #tpu.memory_space<vmem>>, %arg2: memref<8x128x128xf32, #tpu.memory_space<vmem>>, %arg3: memref<8x128xf32, #tpu.memory_space<vmem>>, %arg4: memref<128x128xf32, #tpu.memory_space<vmem>>, %arg5: memref<8x128xf32, #tpu.memory_space<vmem>>) attributes {dimension_semantics = [#tpu.dimension_semantics<parallel>], iteration_bounds = array<i64: 1>, scalar_prefetch = 0 : i64, scratch_operands = 0 : i64, tpu.core_type = #tpu.core_type<tc>, window_params = [{transform_indices = @transform_0, window_bounds = array<i64: 8, 128>}, {pipeline_mode = #tpu.pipeline_mode<synchronous>, transform_indices = @transform_1, window_bounds = array<i64: 8, 128, 128>}, {pipeline_mode = #tpu.pipeline_mode<synchronous>, transform_indices = @transform_2, window_bounds = array<i64: 8, 128>}, {pipeline_mode = #tpu.pipeline_mode<synchronous>, transform_indices = @transform_3, window_bounds = array<i64: 128, 128>}, {transform_indices = @transform_4, window_bounds = array<i64: 8, 128>}]} {
    %c0 = arith.constant 0 : index
    %c0_0 = arith.constant 0 : index
    %0 = vector.load %arg1[%c0, %c0_0] : memref<8x128xf32, #tpu.memory_space<vmem>>, vector<8x128xf32>
    %1 = arith.mulf %0, %0 : vector<8x128xf32>
    %c0_1 = arith.constant 0 : index
    %c0_2 = arith.constant 0 : index
    %2 = vector.load %arg4[%c0_1, %c0_2] : memref<128x128xf32, #tpu.memory_space<vmem>>, vector<128x128xf32>
    %cst = arith.constant dense<0.000000e+00> : vector<8x128xf32>
    %3 = tpu.matmul %1, %2, %cst {dimension_numbers = #tpu.dot_dimension_numbers<[1], [0], [0], [1], [0, 0, 1, 1], [], []>} : vector<8x128xf32>, vector<128x128xf32>, vector<8x128xf32> -> vector<8x128xf32>
    %cst_3 = arith.constant 1.000000e-24 : f32
    %4 = vector.broadcast %cst_3 : f32 to vector<8x128xf32>
    %5 = arith.maximumf %3, %4 : vector<8x128xf32>
    %6 = math.rsqrt %5 : vector<8x128xf32>
    %7 = arith.mulf %0, %6 : vector<8x128xf32>
    %c0_4 = arith.constant 0 : index
    %c0_5 = arith.constant 0 : index
    %8 = vector.load %arg3[%c0_4, %c0_5] : memref<8x128xf32, #tpu.memory_space<vmem>>, vector<8x128xf32>
    %c0_6 = arith.constant 0 : index
    %c0_7 = arith.constant 0 : index
    %c0_8 = arith.constant 0 : index
    %9 = vector.load %arg2[%c0_6, %c0_7, %c0_8] : memref<8x128x128xf32, #tpu.memory_space<vmem>>, vector<1x128x128xf32>
    %10 = vector.shape_cast %9 : vector<1x128x128xf32> to vector<128x128xf32>
    %cst_9 = arith.constant dense<0.000000e+00> : vector<8x128xf32>
    %11 = tpu.matmul %7, %10, %cst_9 {dimension_numbers = #tpu.dot_dimension_numbers<[1], [0], [0], [1], [0, 0, 1, 1], [], []>} : vector<8x128xf32>, vector<128x128xf32>, vector<8x128xf32> -> vector<8x128xf32>
    %12 = vector.extract_strided_slice %8 {offsets = [0, 0], sizes = [1, 128], strides = [1, 1]} : vector<8x128xf32> to vector<1x128xf32>
    %13 = vector.shape_cast %12 : vector<1x128xf32> to vector<128xf32>
    %14 = vector.shape_cast %13 : vector<128xf32> to vector<1x128xf32>
    %15 = vector.broadcast %14 : vector<1x128xf32> to vector<8x128xf32>
    %16 = arith.addf %11, %15 : vector<8x128xf32>
    %cst_10 = arith.constant 0.000000e+00 : f32
    %17 = vector.broadcast %cst_10 : f32 to vector<8x128xf32>
    %18 = arith.cmpf oge, %16, %17 : vector<8x128xf32>
    %cst_11 = arith.constant 2.000000e-01 : f32
    %19 = vector.broadcast %cst_11 : f32 to vector<8x128xf32>
    %20 = arith.mulf %19, %16 : vector<8x128xf32>
    %21 = arith.select %18, %16, %20 : vector<8x128xi1>, vector<8x128xf32>
    %c1 = arith.constant 1 : index
    %c0_12 = arith.constant 0 : index
    %c0_13 = arith.constant 0 : index
    %22 = vector.load %arg2[%c1, %c0_12, %c0_13] : memref<8x128x128xf32, #tpu.memory_space<vmem>>, vector<1x128x128xf32>
    %23 = vector.shape_cast %22 : vector<1x128x128xf32> to vector<128x128xf32>
    %cst_14 = arith.constant dense<0.000000e+00> : vector<8x128xf32>
    %24 = tpu.matmul %21, %23, %cst_14 {dimension_numbers = #tpu.dot_dimension_numbers<[1], [0], [0], [1], [0, 0, 1, 1], [], []>} : vector<8x128xf32>, vector<128x128xf32>, vector<8x128xf32> -> vector<8x128xf32>
    %25 = vector.extract_strided_slice %8 {offsets = [1, 0], sizes = [1, 128], strides = [1, 1]} : vector<8x128xf32> to vector<1x128xf32>
    %26 = vector.shape_cast %25 : vector<1x128xf32> to vector<128xf32>
    %27 = vector.shape_cast %26 : vector<128xf32> to vector<1x128xf32>
    %28 = vector.broadcast %27 : vector<1x128xf32> to vector<8x128xf32>
    %29 = arith.addf %24, %28 : vector<8x128xf32>
    %cst_15 = arith.constant 0.000000e+00 : f32
    %30 = vector.broadcast %cst_15 : f32 to vector<8x128xf32>
    %31 = arith.cmpf oge, %29, %30 : vector<8x128xf32>
    %cst_16 = arith.constant 2.000000e-01 : f32
    %32 = vector.broadcast %cst_16 : f32 to vector<8x128xf32>
    %33 = arith.mulf %32, %29 : vector<8x128xf32>
    %34 = arith.select %31, %29, %33 : vector<8x128xi1>, vector<8x128xf32>
    %c2 = arith.constant 2 : index
    %c0_17 = arith.constant 0 : index
    %c0_18 = arith.constant 0 : index
    %35 = vector.load %arg2[%c2, %c0_17, %c0_18] : memref<8x128x128xf32, #tpu.memory_space<vmem>>, vector<1x128x128xf32>
    %36 = vector.shape_cast %35 : vector<1x128x128xf32> to vector<128x128xf32>
    %cst_19 = arith.constant dense<0.000000e+00> : vector<8x128xf32>
    %37 = tpu.matmul %34, %36, %cst_19 {dimension_numbers = #tpu.dot_dimension_numbers<[1], [0], [0], [1], [0, 0, 1, 1], [], []>} : vector<8x128xf32>, vector<128x128xf32>, vector<8x128xf32> -> vector<8x128xf32>
    %38 = vector.extract_strided_slice %8 {offsets = [2, 0], sizes = [1, 128], strides = [1, 1]} : vector<8x128xf32> to vector<1x128xf32>
    %39 = vector.shape_cast %38 : vector<1x128xf32> to vector<128xf32>
    %40 = vector.shape_cast %39 : vector<128xf32> to vector<1x128xf32>
    %41 = vector.broadcast %40 : vector<1x128xf32> to vector<8x128xf32>
    %42 = arith.addf %37, %41 : vector<8x128xf32>
    %cst_20 = arith.constant 0.000000e+00 : f32
    %43 = vector.broadcast %cst_20 : f32 to vector<8x128xf32>
    %44 = arith.cmpf oge, %42, %43 : vector<8x128xf32>
    %cst_21 = arith.constant 2.000000e-01 : f32
    %45 = vector.broadcast %cst_21 : f32 to vector<8x128xf32>
    %46 = arith.mulf %45, %42 : vector<8x128xf32>
    %47 = arith.select %44, %42, %46 : vector<8x128xi1>, vector<8x128xf32>
    %c3 = arith.constant 3 : index
    %c0_22 = arith.constant 0 : index
    %c0_23 = arith.constant 0 : index
    %48 = vector.load %arg2[%c3, %c0_22, %c0_23] : memref<8x128x128xf32, #tpu.memory_space<vmem>>, vector<1x128x128xf32>
    %49 = vector.shape_cast %48 : vector<1x128x128xf32> to vector<128x128xf32>
    %cst_24 = arith.constant dense<0.000000e+00> : vector<8x128xf32>
    %50 = tpu.matmul %47, %49, %cst_24 {dimension_numbers = #tpu.dot_dimension_numbers<[1], [0], [0], [1], [0, 0, 1, 1], [], []>} : vector<8x128xf32>, vector<128x128xf32>, vector<8x128xf32> -> vector<8x128xf32>
    %51 = vector.extract_strided_slice %8 {offsets = [3, 0], sizes = [1, 128], strides = [1, 1]} : vector<8x128xf32> to vector<1x128xf32>
    %52 = vector.shape_cast %51 : vector<1x128xf32> to vector<128xf32>
    %53 = vector.shape_cast %52 : vector<128xf32> to vector<1x128xf32>
    %54 = vector.broadcast %53 : vector<1x128xf32> to vector<8x128xf32>
    %55 = arith.addf %50, %54 : vector<8x128xf32>
    %cst_25 = arith.constant 0.000000e+00 : f32
    %56 = vector.broadcast %cst_25 : f32 to vector<8x128xf32>
    %57 = arith.cmpf oge, %55, %56 : vector<8x128xf32>
    %cst_26 = arith.constant 2.000000e-01 : f32
    %58 = vector.broadcast %cst_26 : f32 to vector<8x128xf32>
    %59 = arith.mulf %58, %55 : vector<8x128xf32>
    %60 = arith.select %57, %55, %59 : vector<8x128xi1>, vector<8x128xf32>
    %c4 = arith.constant 4 : index
    %c0_27 = arith.constant 0 : index
    %c0_28 = arith.constant 0 : index
    %61 = vector.load %arg2[%c4, %c0_27, %c0_28] : memref<8x128x128xf32, #tpu.memory_space<vmem>>, vector<1x128x128xf32>
    %62 = vector.shape_cast %61 : vector<1x128x128xf32> to vector<128x128xf32>
    %cst_29 = arith.constant dense<0.000000e+00> : vector<8x128xf32>
    %63 = tpu.matmul %60, %62, %cst_29 {dimension_numbers = #tpu.dot_dimension_numbers<[1], [0], [0], [1], [0, 0, 1, 1], [], []>} : vector<8x128xf32>, vector<128x128xf32>, vector<8x128xf32> -> vector<8x128xf32>
    %64 = vector.extract_strided_slice %8 {offsets = [4, 0], sizes = [1, 128], strides = [1, 1]} : vector<8x128xf32> to vector<1x128xf32>
    %65 = vector.shape_cast %64 : vector<1x128xf32> to vector<128xf32>
    %66 = vector.shape_cast %65 : vector<128xf32> to vector<1x128xf32>
    %67 = vector.broadcast %66 : vector<1x128xf32> to vector<8x128xf32>
    %68 = arith.addf %63, %67 : vector<8x128xf32>
    %cst_30 = arith.constant 0.000000e+00 : f32
    %69 = vector.broadcast %cst_30 : f32 to vector<8x128xf32>
    %70 = arith.cmpf oge, %68, %69 : vector<8x128xf32>
    %cst_31 = arith.constant 2.000000e-01 : f32
    %71 = vector.broadcast %cst_31 : f32 to vector<8x128xf32>
    %72 = arith.mulf %71, %68 : vector<8x128xf32>
    %73 = arith.select %70, %68, %72 : vector<8x128xi1>, vector<8x128xf32>
    %c5 = arith.constant 5 : index
    %c0_32 = arith.constant 0 : index
    %c0_33 = arith.constant 0 : index
    %74 = vector.load %arg2[%c5, %c0_32, %c0_33] : memref<8x128x128xf32, #tpu.memory_space<vmem>>, vector<1x128x128xf32>
    %75 = vector.shape_cast %74 : vector<1x128x128xf32> to vector<128x128xf32>
    %cst_34 = arith.constant dense<0.000000e+00> : vector<8x128xf32>
    %76 = tpu.matmul %73, %75, %cst_34 {dimension_numbers = #tpu.dot_dimension_numbers<[1], [0], [0], [1], [0, 0, 1, 1], [], []>} : vector<8x128xf32>, vector<128x128xf32>, vector<8x128xf32> -> vector<8x128xf32>
    %77 = vector.extract_strided_slice %8 {offsets = [5, 0], sizes = [1, 128], strides = [1, 1]} : vector<8x128xf32> to vector<1x128xf32>
    %78 = vector.shape_cast %77 : vector<1x128xf32> to vector<128xf32>
    %79 = vector.shape_cast %78 : vector<128xf32> to vector<1x128xf32>
    %80 = vector.broadcast %79 : vector<1x128xf32> to vector<8x128xf32>
    %81 = arith.addf %76, %80 : vector<8x128xf32>
    %cst_35 = arith.constant 0.000000e+00 : f32
    %82 = vector.broadcast %cst_35 : f32 to vector<8x128xf32>
    %83 = arith.cmpf oge, %81, %82 : vector<8x128xf32>
    %cst_36 = arith.constant 2.000000e-01 : f32
    %84 = vector.broadcast %cst_36 : f32 to vector<8x128xf32>
    %85 = arith.mulf %84, %81 : vector<8x128xf32>
    %86 = arith.select %83, %81, %85 : vector<8x128xi1>, vector<8x128xf32>
    %c6 = arith.constant 6 : index
    %c0_37 = arith.constant 0 : index
    %c0_38 = arith.constant 0 : index
    %87 = vector.load %arg2[%c6, %c0_37, %c0_38] : memref<8x128x128xf32, #tpu.memory_space<vmem>>, vector<1x128x128xf32>
    %88 = vector.shape_cast %87 : vector<1x128x128xf32> to vector<128x128xf32>
    %cst_39 = arith.constant dense<0.000000e+00> : vector<8x128xf32>
    %89 = tpu.matmul %86, %88, %cst_39 {dimension_numbers = #tpu.dot_dimension_numbers<[1], [0], [0], [1], [0, 0, 1, 1], [], []>} : vector<8x128xf32>, vector<128x128xf32>, vector<8x128xf32> -> vector<8x128xf32>
    %90 = vector.extract_strided_slice %8 {offsets = [6, 0], sizes = [1, 128], strides = [1, 1]} : vector<8x128xf32> to vector<1x128xf32>
    %91 = vector.shape_cast %90 : vector<1x128xf32> to vector<128xf32>
    %92 = vector.shape_cast %91 : vector<128xf32> to vector<1x128xf32>
    %93 = vector.broadcast %92 : vector<1x128xf32> to vector<8x128xf32>
    %94 = arith.addf %89, %93 : vector<8x128xf32>
    %cst_40 = arith.constant 0.000000e+00 : f32
    %95 = vector.broadcast %cst_40 : f32 to vector<8x128xf32>
    %96 = arith.cmpf oge, %94, %95 : vector<8x128xf32>
    %cst_41 = arith.constant 2.000000e-01 : f32
    %97 = vector.broadcast %cst_41 : f32 to vector<8x128xf32>
    %98 = arith.mulf %97, %94 : vector<8x128xf32>
    %99 = arith.select %96, %94, %98 : vector<8x128xi1>, vector<8x128xf32>
    %c7 = arith.constant 7 : index
    %c0_42 = arith.constant 0 : index
    %c0_43 = arith.constant 0 : index
    %100 = vector.load %arg2[%c7, %c0_42, %c0_43] : memref<8x128x128xf32, #tpu.memory_space<vmem>>, vector<1x128x128xf32>
    %101 = vector.shape_cast %100 : vector<1x128x128xf32> to vector<128x128xf32>
    %cst_44 = arith.constant dense<0.000000e+00> : vector<8x128xf32>
    %102 = tpu.matmul %99, %101, %cst_44 {dimension_numbers = #tpu.dot_dimension_numbers<[1], [0], [0], [1], [0, 0, 1, 1], [], []>} : vector<8x128xf32>, vector<128x128xf32>, vector<8x128xf32> -> vector<8x128xf32>
    %103 = vector.extract_strided_slice %8 {offsets = [7, 0], sizes = [1, 128], strides = [1, 1]} : vector<8x128xf32> to vector<1x128xf32>
    %104 = vector.shape_cast %103 : vector<1x128xf32> to vector<128xf32>
    %105 = vector.shape_cast %104 : vector<128xf32> to vector<1x128xf32>
    %106 = vector.broadcast %105 : vector<1x128xf32> to vector<8x128xf32>
    %107 = arith.addf %102, %106 : vector<8x128xf32>
    %cst_45 = arith.constant 0.000000e+00 : f32
    %108 = vector.broadcast %cst_45 : f32 to vector<8x128xf32>
    %109 = arith.cmpf oge, %107, %108 : vector<8x128xf32>
    %cst_46 = arith.constant 2.000000e-01 : f32
    %110 = vector.broadcast %cst_46 : f32 to vector<8x128xf32>
    %111 = arith.mulf %110, %107 : vector<8x128xf32>
    %112 = arith.select %109, %107, %111 : vector<8x128xi1>, vector<8x128xf32>
    %c0_47 = arith.constant 0 : index
    %c0_48 = arith.constant 0 : index
    %113 = vector.load %arg5[%c0_47, %c0_48] : memref<8x128xf32, #tpu.memory_space<vmem>>, vector<8x128xf32>
    tpu.vector_store %arg5[%c0_47, %c0_48], %112 {strides = array<i32>} : memref<8x128xf32, #tpu.memory_space<vmem>>, vector<8x128xf32>,
    return
  }
  func.func @transform_0(%arg0: i32) -> (i32, i32) {
    %c0_i32 = arith.constant 0 : i32
    %c0_i32_0 = arith.constant 0 : i32
    return %arg0, %c0_i32 : i32, i32
  }
  func.func @transform_1(%arg0: i32) -> (i32, i32, i32) {
    %c0_i32 = arith.constant 0 : i32
    %c0_i32_0 = arith.constant 0 : i32
    %c0_i32_1 = arith.constant 0 : i32
    %c0_i32_2 = arith.constant 0 : i32
    return %c0_i32, %c0_i32_0, %c0_i32_1 : i32, i32, i32
  }
  func.func @transform_2(%arg0: i32) -> (i32, i32) {
    %c0_i32 = arith.constant 0 : i32
    %c0_i32_0 = arith.constant 0 : i32
    %c0_i32_1 = arith.constant 0 : i32
    return %c0_i32, %c0_i32_0 : i32, i32
  }
  func.func @transform_3(%arg0: i32) -> (i32, i32) {
    %c0_i32 = arith.constant 0 : i32
    %c0_i32_0 = arith.constant 0 : i32
    %c0_i32_1 = arith.constant 0 : i32
    return %c0_i32, %c0_i32_0 : i32, i32
  }
  func.func @transform_4(%arg0: i32) -> (i32, i32) {
    %c0_i32 = arith.constant 0 : i32
    %c0_i32_0 = arith.constant 0 : i32
    return %arg0, %c0_i32 : i32, i32
  }
}

</mosaic_0001>

<llo_original>
// kernel: tpu_custom_call.1
$region0: #{tpu_custom_call.1}
  #allocation0 [shape = 'u32[]', space=smem, size = 0x4, offset = 0x4, fixed_abs, tag = 'smem constant byte address 0x4 - core index']
  #allocation1 [shape = 'u32[144,128]{1,0:T(1,128)}', space=vmem, size = 0x12000, scoped, tag = 'internal scratch']
  %s0 = inlined_call_operand.hbm [shape: f32[8,128], index: 0, kind: input, shape index: {}]
  %s1 = inlined_call_operand.hbm [shape: f32[8,128,128], index: 1, kind: input, shape index: {}]
  %s2 = inlined_call_operand.hbm [shape: f32[8,128], index: 2, kind: input, shape index: {}]
  %s3 = inlined_call_operand.hbm [shape: f32[128,128], index: 3, kind: input, shape index: {}]
  %s4 = inlined_call_operand.hbm [shape: f32[8,128], index: 4, kind: output, shape index: {}]
  %s5 = sld [smem:[#allocation0]]
  $region42: #{tpu_custom_call.1} parent=0
    _
  %s7 = ssub.s32 1, %s5
  %s8 = scalar_select 0, %s7, %s5
  $region1: #{tpu_custom_call.1} parent=0
    #allocation2 [shape = 'u8[4096]{0}', space=vmem, size = 0x1000, scoped, tag = 'input window, operand 0, single buffered']
    #allocation3 [shape = 's32[1]{0}', space=sflag, size = 0x4, scoped, tag = 'scoped memory for tpu_custom_call.1']
    #allocation4 [shape = 's32[1]{0}', space=sflag, size = 0x4, scoped, tag = 'scoped memory for tpu_custom_call.1']
    #allocation5 [shape = 'u8[524288]{0}', space=vmem, size = 0x80000, scoped, tag = 'input window, operand 1, single buffered']
    #allocation6 [shape = 's32[1]{0}', space=sflag, size = 0x4, scoped, tag = 'scoped memory for tpu_custom_call.1']
    #allocation7 [shape = 'u8[4096]{0}', space=vmem, size = 0x1000, scoped, tag = 'input window, operand 2, single buffered']
    #allocation8 [shape = 'u8[65536]{0}', space=vmem, size = 0x10000, scoped, tag = 'input window, operand 3, single buffered']
    #allocation9 [shape = 's32[1]{0}', space=sflag, size = 0x4, scoped, tag = 'scoped memory for tpu_custom_call.1']
    #allocation10 [shape = 'u8[4096]{0}', space=vmem, size = 0x1000, scoped, tag = 'output window, operand 0, single buffered']
    %9 = vsyncpa [#allocation3], 0
    %10 = vsyncpa [#allocation6], 0
    %11 = vsyncpa [#allocation9], 0
    %12 = vsyncpa [#allocation4], 0
    // Predicated region
    $region2: #{tpu_custom_call.1} parent=1 // pred_check
      _
    $region3: #{tpu_custom_call.1} parent=1 // pred_check_branch
      %14 = sbr.rel (0) target = $region5
    $region4: #{tpu_custom_call.1} parent=1 // pred_region
      %s16 = ssub.s32 128, 128
      %17 = vsyncadd [#allocation3], %s16
      %s19 = sshll.u32 [#allocation2], 4
      %s20 = int_to_ptr.vmem [resolvable:$true] %s19
      %22 = dma.hbm_to_vmem [thread:$0]  %s0, 128, %s20, [#allocation3]
    $region5: #{tpu_custom_call.1} parent=1 // pred_fallthru
      _
    // Predicated region
    $region6: #{tpu_custom_call.1} parent=1 // pred_check
      _
    $region7: #{tpu_custom_call.1} parent=1 // pred_check_branch
      %24 = sbr.rel (0) target = $region9
    $region8: #{tpu_custom_call.1} parent=1 // pred_region
      %s26 = ssub.s32 16384, 16384
      %27 = vsyncadd [#allocation6], %s26
      %s28 = sshll.u32 [#allocation5], 4
      %s29 = int_to_ptr.vmem [resolvable:$true] %s28
      %34 = dma.hbm_to_vmem [thread:$0]  %s1, 16384, %s29, [#allocation6], 128, 128, 8
    $region9: #{tpu_custom_call.1} parent=1 // pred_fallthru
      _
    // Predicated region
    $region10: #{tpu_custom_call.1} parent=1 // pred_check
      _
    $region11: #{tpu_custom_call.1} parent=1 // pred_check_branch
      %36 = sbr.rel (0) target = $region13
    $region12: #{tpu_custom_call.1} parent=1 // pred_region
      %s38 = ssub.s32 128, 128
      %39 = vsyncadd [#allocation6], %s38
      %s41 = sshll.u32 [#allocation7], 4
      %s42 = int_to_ptr.vmem [resolvable:$true] %s41
      %44 = dma.hbm_to_vmem [thread:$0]  %s2, 128, %s42, [#allocation6]
    $region13: #{tpu_custom_call.1} parent=1 // pred_fallthru
      _
    // Predicated region
    $region14: #{tpu_custom_call.1} parent=1 // pred_check
      _
    $region15: #{tpu_custom_call.1} parent=1 // pred_check_branch
      %46 = sbr.rel (0) target = $region17
    $region16: #{tpu_custom_call.1} parent=1 // pred_region
      %s48 = ssub.s32 2048, 2048
      %49 = vsyncadd [#allocation9], %s48
      %s50 = sshll.u32 [#allocation8], 4
      %s51 = int_to_ptr.vmem [resolvable:$true] %s50
      %56 = dma.hbm_to_vmem [thread:$0]  %s3, 2048, %s51, [#allocation9], 128, 128, 8
    $region17: #{tpu_custom_call.1} parent=1 // pred_fallthru
      _
    // Predicated region
    $region18: #{tpu_custom_call.1} parent=1 // pred_check
      _
    $region19: #{tpu_custom_call.1} parent=1 // pred_check_branch
      %58 = sbr.rel (0) target = $region21
    $region20: #{tpu_custom_call.1} parent=1 // pred_region
      %59 = dma.done [#allocation3], 128
    $region21: #{tpu_custom_call.1} parent=1 // pred_fallthru
      _
    // Predicated region
    $region22: #{tpu_custom_call.1} parent=1 // pred_check
      _
    $region23: #{tpu_custom_call.1} parent=1 // pred_check_branch
      %61 = sbr.rel (0) target = $region25
    $region24: #{tpu_custom_call.1} parent=1 // pred_region
      %62 = dma.done [#allocation6], 16384
    $region25: #{tpu_custom_call.1} parent=1 // pred_fallthru
      _
    // Predicated region
    $region26: #{tpu_custom_call.1} parent=1 // pred_check
      _
    $region27: #{tpu_custom_call.1} parent=1 // pred_check_branch
      %64 = sbr.rel (0) target = $region29
    $region28: #{tpu_custom_call.1} parent=1 // pred_region
      %65 = dma.done [#allocation6], 128
    $region29: #{tpu_custom_call.1} parent=1 // pred_fallthru
      _
    // Predicated region
    $region30: #{tpu_custom_call.1} parent=1 // pred_check
      _
    $region31: #{tpu_custom_call.1} parent=1 // pred_check_branch
      %67 = sbr.rel (0) target = $region33
    $region32: #{tpu_custom_call.1} parent=1 // pred_region
      %68 = dma.done [#allocation9], 2048
    $region33: #{tpu_custom_call.1} parent=1 // pred_fallthru
      _
    %v69 = vld [vmem:[#allocation2] sm:$0xff]
    %v70 = vmul.f32 %v69, %v69
    %v71 = vld [vmem:[#allocation8] sm:$0xff]
    %v72 = vld [vmem:[#allocation8 + $0x8] sm:$0xff]
    %v73 = vld [vmem:[#allocation8 + $0x10] sm:$0xff]
    %v74 = vld [vmem:[#allocation8 + $0x18] sm:$0xff]
    %v75 = vld [vmem:[#allocation8 + $0x20] sm:$0xff]
    %v76 = vld [vmem:[#allocation8 + $0x28] sm:$0xff]
    %v77 = vld [vmem:[#allocation8 + $0x30] sm:$0xff]
    %v78 = vld [vmem:[#allocation8 + $0x38] sm:$0xff]
    %v79 = vld [vmem:[#allocation8 + $0x40] sm:$0xff]
    %v80 = vld [vmem:[#allocation8 + $0x48] sm:$0xff]
    %v81 = vld [vmem:[#allocation8 + $0x50] sm:$0xff]
    %v82 = vld [vmem:[#allocation8 + $0x58] sm:$0xff]
    %v83 = vld [vmem:[#allocation8 + $0x60] sm:$0xff]
    %v84 = vld [vmem:[#allocation8 + $0x68] sm:$0xff]
    %v85 = vld [vmem:[#allocation8 + $0x70] sm:$0xff]
    %v86 = vld [vmem:[#allocation8 + $0x78] sm:$0xff]
    %87 = vmatprep.subr.mxu0 0.0
    %88 = vmatpush1.msra.mxu0 %v86
    %89 = vmatprep.subr.mxu0 0.0
    %90 = vmatpush1.msra.mxu0 %v85
    %91 = vmatprep.subr.mxu0 0.0
    %92 = vmatpush1.msra.mxu0 %v84
    %93 = vmatprep.subr.mxu0 0.0
    %94 = vmatpush1.msra.mxu0 %v83
    %95 = vmatprep.subr.mxu0 0.0
    %96 = vmatpush1.msra.mxu0 %v82
    %97 = vmatprep.subr.mxu0 0.0
    %98 = vmatpush1.msra.mxu0 %v81
    %99 = vmatprep.subr.mxu0 0.0
    %100 = vmatpush1.msra.mxu0 %v80
    %101 = vmatprep.subr.mxu0 0.0
    %102 = vmatpush1.msra.mxu0 %v79
    %103 = vmatprep.subr.mxu0 0.0
    %104 = vmatpush1.msra.mxu0 %v78
    %105 = vmatprep.subr.mxu0 0.0
    %106 = vmatpush1.msra.mxu0 %v77
    %107 = vmatprep.subr.mxu0 0.0
    %108 = vmatpush1.msra.mxu0 %v76
    %109 = vmatprep.subr.mxu0 0.0
    %110 = vmatpush1.msra.mxu0 %v75
    %111 = vmatprep.subr.mxu0 0.0
    %112 = vmatpush1.msra.mxu0 %v74
    %113 = vmatprep.subr.mxu0 0.0
    %114 = vmatpush1.msra.mxu0 %v73
    %115 = vmatprep.subr.mxu0 0.0
    %116 = vmatpush1.msra.mxu0 %v72
    %117 = vmatprep.subr.mxu0 0.0
    %118 = vmatpush1.msra.mxu0 %v71
    %119 = vmatprep.subr.mxu0 0.0
    %120 = vmatpush2.msra.mxu0 0.0
    %121 = vmatprep.subr.mxu0 0.0
    %122 = vmatpush2.msra.mxu0 0.0
    %123 = vmatprep.subr.mxu0 0.0
    %124 = vmatpush2.msra.mxu0 0.0
    %125 = vmatprep.subr.mxu0 0.0
    %126 = vmatpush2.msra.mxu0 0.0
    %127 = vmatprep.subr.mxu0 0.0
    %128 = vmatpush2.msra.mxu0 0.0
    %129 = vmatprep.subr.mxu0 0.0
    %130 = vmatpush2.msra.mxu0 0.0
    %131 = vmatprep.subr.mxu0 0.0
    %132 = vmatpush2.msra.mxu0 0.0
    %133 = vmatprep.subr.mxu0 0.0
    %134 = vmatpush2.msra.mxu0 0.0
    %135 = vmatprep.subr.mxu0 0.0
    %136 = vmatpush2.msra.mxu0 0.0
    %137 = vmatprep.subr.mxu0 0.0
    %138 = vmatpush2.msra.mxu0 0.0
    %139 = vmatprep.subr.mxu0 0.0
    %140 = vmatpush2.msra.mxu0 0.0
    %141 = vmatprep.subr.mxu0 0.0
    %142 = vmatpush2.msra.mxu0 0.0
    %143 = vmatprep.subr.mxu0 0.0
    %144 = vmatpush2.msra.mxu0 0.0
    %145 = vmatprep.subr.mxu0 0.0
    %146 = vmatpush2.msra.mxu0 0.0
    %147 = vmatprep.subr.mxu0 0.0
    %148 = vmatpush2.msra.mxu0 0.0
    %149 = vmatprep.subr.mxu0 0.0
    %150 = vmatpush2.msra.mxu0 0.0
    %151 = vmatprep.mubr.f32.mxu0 0.0
    %152 = vmatmul.mubr.f32.gmra.mxu0 %v70
    %v153 = vpop.f32.mrf.mxu0
    %v154 = vadd.f32 0.0, %v153
    %v155 = vpop.f32.mrf.mxu0
    %156 = vdwg.mxu0
    %v157 = vmax.f32 %v154, 1e-24
    %v158 = vrsqrt.pop %v157
    %v159 = vmul.f32 %v69, %v158
    %v160 = vld [vmem:[#allocation7] sm:$0xff]
    %v161 = vld [vmem:[#allocation5] sm:$0xff]
    %v162 = vld [vmem:[#allocation5 + $0x8] sm:$0xff]
    %v163 = vld [vmem:[#allocation5 + $0x10] sm:$0xff]
    %v164 = vld [vmem:[#allocation5 + $0x18] sm:$0xff]
    %v165 = vld [vmem:[#allocation5 + $0x20] sm:$0xff]
    %v166 = vld [vmem:[#allocation5 + $0x28] sm:$0xff]
    %v167 = vld [vmem:[#allocation5 + $0x30] sm:$0xff]
    %v168 = vld [vmem:[#allocation5 + $0x38] sm:$0xff]
    %v169 = vld [vmem:[#allocation5 + $0x40] sm:$0xff]
    %v170 = vld [vmem:[#allocation5 + $0x48] sm:$0xff]
    %v171 = vld [vmem:[#allocation5 + $0x50] sm:$0xff]
    %v172 = vld [vmem:[#allocation5 + $0x58] sm:$0xff]
    %v173 = vld [vmem:[#allocation5 + $0x60] sm:$0xff]
    %v174 = vld [vmem:[#allocation5 + $0x68] sm:$0xff]
    %v175 = vld [vmem:[#allocation5 + $0x70] sm:$0xff]
    %v176 = vld [vmem:[#allocation5 + $0x78] sm:$0xff]
    %v177 = vlaneseq
    %v178 = vshrl.u32 %v177, 7
    %v179 = vsub.s32 0, %v178
    %v180 = vrot.slane %v160, %v179
    %181 = vmatprep.subr.mxu0 0.0
    %182 = vmatpush1.msra.mxu0 %v176
    %183 = vmatprep.subr.mxu0 0.0
    %184 = vmatpush1.msra.mxu0 %v175
    %185 = vmatprep.subr.mxu0 0.0
    %186 = vmatpush1.msra.mxu0 %v174
    %187 = vmatprep.subr.mxu0 0.0
    %188 = vmatpush1.msra.mxu0 %v173
    %189 = vmatprep.subr.mxu0 0.0
    %190 = vmatpush1.msra.mxu0 %v172
    %191 = vmatprep.subr.mxu0 0.0
    %192 = vmatpush1.msra.mxu0 %v171
    %193 = vmatprep.subr.mxu0 0.0
    %194 = vmatpush1.msra.mxu0 %v170
    %195 = vmatprep.subr.mxu0 0.0
    %196 = vmatpush1.msra.mxu0 %v169
    %197 = vmatprep.subr.mxu0 0.0
    %198 = vmatpush1.msra.mxu0 %v168
    %199 = vmatprep.subr.mxu0 0.0
    %200 = vmatpush1.msra.mxu0 %v167
    %201 = vmatprep.subr.mxu0 0.0
    %202 = vmatpush1.msra.mxu0 %v166
    %203 = vmatprep.subr.mxu0 0.0
    %204 = vmatpush1.msra.mxu0 %v165
    %205 = vmatprep.subr.mxu0 0.0
    %206 = vmatpush1.msra.mxu0 %v164
    %207 = vmatprep.subr.mxu0 0.0
    %208 = vmatpush1.msra.mxu0 %v163
    %209 = vmatprep.subr.mxu0 0.0
    %210 = vmatpush1.msra.mxu0 %v162
    %211 = vmatprep.subr.mxu0 0.0
    %212 = vmatpush1.msra.mxu0 %v161
    %213 = vmatprep.subr.mxu0 0.0
    %214 = vmatpush2.msra.mxu0 0.0
    %215 = vmatprep.subr.mxu0 0.0
    %216 = vmatpush2.msra.mxu0 0.0
    %217 = vmatprep.subr.mxu0 0.0
    %218 = vmatpush2.msra.mxu0 0.0
    %219 = vmatprep.subr.mxu0 0.0
    %220 = vmatpush2.msra.mxu0 0.0
    %221 = vmatprep.subr.mxu0 0.0
    %222 = vmatpush2.msra.mxu0 0.0
    %223 = vmatprep.subr.mxu0 0.0
    %224 = vmatpush2.msra.mxu0 0.0
    %225 = vmatprep.subr.mxu0 0.0
    %226 = vmatpush2.msra.mxu0 0.0
    %227 = vmatprep.subr.mxu0 0.0
    %228 = vmatpush2.msra.mxu0 0.0
    %229 = vmatprep.subr.mxu0 0.0
    %230 = vmatpush2.msra.mxu0 0.0
    %231 = vmatprep.subr.mxu0 0.0
    %232 = vmatpush2.msra.mxu0 0.0
    %233 = vmatprep.subr.mxu0 0.0
    %234 = vmatpush2.msra.mxu0 0.0
    %235 = vmatprep.subr.mxu0 0.0
    %236 = vmatpush2.msra.mxu0 0.0
    %237 = vmatprep.subr.mxu0 0.0
    %238 = vmatpush2.msra.mxu0 0.0
    %239 = vmatprep.subr.mxu0 0.0
    %240 = vmatpush2.msra.mxu0 0.0
    %241 = vmatprep.subr.mxu0 0.0
    %242 = vmatpush2.msra.mxu0 0.0
    %243 = vmatprep.subr.mxu0 0.0
    %244 = vmatpush2.msra.mxu0 0.0
    %245 = vmatprep.mubr.f32.mxu0 0.0
    %246 = vmatmul.mubr.f32.gmra.mxu0 %v159
    %v247 = vpop.f32.mrf.mxu0
    %v248 = vadd.f32 %v180, %v247
    %v249 = vpop.f32.mrf.mxu0
    %250 = vdwg.mxu0
    %vm251 = vcmp.ge.f32.partialorder %v248, 0.0
    %v252 = vmul.f32 %v248, 0.2
    %v253 = vsel %vm251, %v248, %v252
    %s254 = scalar_lea.vmem [#allocation5], 128
    %v255 = vld [vmem:[%s254] sm:$0xff]
    %v256 = vld [vmem:[%s254 + $0x8] sm:$0xff]
    %v257 = vld [vmem:[%s254 + $0x10] sm:$0xff]
    %v258 = vld [vmem:[%s254 + $0x18] sm:$0xff]
    %v259 = vld [vmem:[%s254 + $0x20] sm:$0xff]
    %v260 = vld [vmem:[%s254 + $0x28] sm:$0xff]
    %v261 = vld [vmem:[%s254 + $0x30] sm:$0xff]
    %v262 = vld [vmem:[%s254 + $0x38] sm:$0xff]
    %v263 = vld [vmem:[%s254 + $0x40] sm:$0xff]
    %v264 = vld [vmem:[%s254 + $0x48] sm:$0xff]
    %v265 = vld [vmem:[%s254 + $0x50] sm:$0xff]
    %v266 = vld [vmem:[%s254 + $0x58] sm:$0xff]
    %v267 = vld [vmem:[%s254 + $0x60] sm:$0xff]
    %v268 = vld [vmem:[%s254 + $0x68] sm:$0xff]
    %v269 = vld [vmem:[%s254 + $0x70] sm:$0xff]
    %v270 = vld [vmem:[%s254 + $0x78] sm:$0xff]
    %v271 = vlaneseq
    %v272 = vshrl.u32 %v271, 7
    %v273 = vsub.s32 1, %v272
    %v274 = vrot.slane %v160, %v273
    %275 = vmatprep.subr.mxu0 0.0
    %276 = vmatpush1.msra.mxu0 %v270
    %277 = vmatprep.subr.mxu0 0.0
    %278 = vmatpush1.msra.mxu0 %v269
    %279 = vmatprep.subr.mxu0 0.0
    %280 = vmatpush1.msra.mxu0 %v268
    %281 = vmatprep.subr.mxu0 0.0
    %282 = vmatpush1.msra.mxu0 %v267
    %283 = vmatprep.subr.mxu0 0.0
    %284 = vmatpush1.msra.mxu0 %v266
    %285 = vmatprep.subr.mxu0 0.0
    %286 = vmatpush1.msra.mxu0 %v265
    %287 = vmatprep.subr.mxu0 0.0
    %288 = vmatpush1.msra.mxu0 %v264
    %289 = vmatprep.subr.mxu0 0.0
    %290 = vmatpush1.msra.mxu0 %v263
    %291 = vmatprep.subr.mxu0 0.0
    %292 = vmatpush1.msra.mxu0 %v262
    %293 = vmatprep.subr.mxu0 0.0
    %294 = vmatpush1.msra.mxu0 %v261
    %295 = vmatprep.subr.mxu0 0.0
    %296 = vmatpush1.msra.mxu0 %v260
    %297 = vmatprep.subr.mxu0 0.0
    %298 = vmatpush1.msra.mxu0 %v259
    %299 = vmatprep.subr.mxu0 0.0
    %300 = vmatpush1.msra.mxu0 %v258
    %301 = vmatprep.subr.mxu0 0.0
    %302 = vmatpush1.msra.mxu0 %v257
    %303 = vmatprep.subr.mxu0 0.0
    %304 = vmatpush1.msra.mxu0 %v256
    %305 = vmatprep.subr.mxu0 0.0
    %306 = vmatpush1.msra.mxu0 %v255
    %307 = vmatprep.subr.mxu0 0.0
    %308 = vmatpush2.msra.mxu0 0.0
    %309 = vmatprep.subr.mxu0 0.0
    %310 = vmatpush2.msra.mxu0 0.0
    %311 = vmatprep.subr.mxu0 0.0
    %312 = vmatpush2.msra.mxu0 0.0
    %313 = vmatprep.subr.mxu0 0.0
    %314 = vmatpush2.msra.mxu0 0.0
    %315 = vmatprep.subr.mxu0 0.0
    %316 = vmatpush2.msra.mxu0 0.0
    %317 = vmatprep.subr.mxu0 0.0
    %318 = vmatpush2.msra.mxu0 0.0
    %319 = vmatprep.subr.mxu0 0.0
    %320 = vmatpush2.msra.mxu0 0.0
    %321 = vmatprep.subr.mxu0 0.0
    %322 = vmatpush2.msra.mxu0 0.0
    %323 = vmatprep.subr.mxu0 0.0
    %324 = vmatpush2.msra.mxu0 0.0
    %325 = vmatprep.subr.mxu0 0.0
    %326 = vmatpush2.msra.mxu0 0.0
    %327 = vmatprep.subr.mxu0 0.0
    %328 = vmatpush2.msra.mxu0 0.0
    %329 = vmatprep.subr.mxu0 0.0
    %330 = vmatpush2.msra.mxu0 0.0
    %331 = vmatprep.subr.mxu0 0.0
    %332 = vmatpush2.msra.mxu0 0.0
    %333 = vmatprep.subr.mxu0 0.0
    %334 = vmatpush2.msra.mxu0 0.0
    %335 = vmatprep.subr.mxu0 0.0
    %336 = vmatpush2.msra.mxu0 0.0
    %337 = vmatprep.subr.mxu0 0.0
    %338 = vmatpush2.msra.mxu0 0.0
    %339 = vmatprep.mubr.f32.mxu0 0.0
    %340 = vmatmul.mubr.f32.gmra.mxu0 %v253
    %v341 = vpop.f32.mrf.mxu0
    %v342 = vadd.f32 %v274, %v341
    %v343 = vpop.f32.mrf.mxu0
    %344 = vdwg.mxu0
    %vm345 = vcmp.ge.f32.partialorder %v342, 0.0
    %v346 = vmul.f32 %v342, 0.2
    %v347 = vsel %vm345, %v342, %v346
    %s348 = scalar_lea.vmem [#allocation5], 256
    %v349 = vld [vmem:[%s348] sm:$0xff]
    %v350 = vld [vmem:[%s348 + $0x8] sm:$0xff]
    %v351 = vld [vmem:[%s348 + $0x10] sm:$0xff]
    %v352 = vld [vmem:[%s348 + $0x18] sm:$0xff]
    %v353 = vld [vmem:[%s348 + $0x20] sm:$0xff]
    %v354 = vld [vmem:[%s348 + $0x28] sm:$0xff]
    %v355 = vld [vmem:[%s348 + $0x30] sm:$0xff]
    %v356 = vld [vmem:[%s348 + $0x38] sm:$0xff]
    %v357 = vld [vmem:[%s348 + $0x40] sm:$0xff]
    %v358 = vld [vmem:[%s348 + $0x48] sm:$0xff]
    %v359 = vld [vmem:[%s348 + $0x50] sm:$0xff]
    %v360 = vld [vmem:[%s348 + $0x58] sm:$0xff]
    %v361 = vld [vmem:[%s348 + $0x60] sm:$0xff]
    %v362 = vld [vmem:[%s348 + $0x68] sm:$0xff]
    %v363 = vld [vmem:[%s348 + $0x70] sm:$0xff]
    %v364 = vld [vmem:[%s348 + $0x78] sm:$0xff]
    %v365 = vlaneseq
    %v366 = vshrl.u32 %v365, 7
    %v367 = vsub.s32 2, %v366
    %v368 = vrot.slane %v160, %v367
    %369 = vmatprep.subr.mxu0 0.0
    %370 = vmatpush1.msra.mxu0 %v364
    %371 = vmatprep.subr.mxu0 0.0
    %372 = vmatpush1.msra.mxu0 %v363
    %373 = vmatprep.subr.mxu0 0.0
    %374 = vmatpush1.msra.mxu0 %v362
    %375 = vmatprep.subr.mxu0 0.0
    %376 = vmatpush1.msra.mxu0 %v361
    %377 = vmatprep.subr.mxu0 0.0
    %378 = vmatpush1.msra.mxu0 %v360
    %379 = vmatprep.subr.mxu0 0.0
    %380 = vmatpush1.msra.mxu0 %v359
    %381 = vmatprep.subr.mxu0 0.0
    %382 = vmatpush1.msra.mxu0 %v358
    %383 = vmatprep.subr.mxu0 0.0
    %384 = vmatpush1.msra.mxu0 %v357
    %385 = vmatprep.subr.mxu0 0.0
    %386 = vmatpush1.msra.mxu0 %v356
    %387 = vmatprep.subr.mxu0 0.0
    %388 = vmatpush1.msra.mxu0 %v355
    %389 = vmatprep.subr.mxu0 0.0
    %390 = vmatpush1.msra.mxu0 %v354
    %391 = vmatprep.subr.mxu0 0.0
    %392 = vmatpush1.msra.mxu0 %v353
    %393 = vmatprep.subr.mxu0 0.0
    %394 = vmatpush1.msra.mxu0 %v352
    %395 = vmatprep.subr.mxu0 0.0
    %396 = vmatpush1.msra.mxu0 %v351
    %397 = vmatprep.subr.mxu0 0.0
    %398 = vmatpush1.msra.mxu0 %v350
    %399 = vmatprep.subr.mxu0 0.0
    %400 = vmatpush1.msra.mxu0 %v349
    %401 = vmatprep.subr.mxu0 0.0
    %402 = vmatpush2.msra.mxu0 0.0
    %403 = vmatprep.subr.mxu0 0.0
    %404 = vmatpush2.msra.mxu0 0.0
    %405 = vmatprep.subr.mxu0 0.0
    %406 = vmatpush2.msra.mxu0 0.0
    %407 = vmatprep.subr.mxu0 0.0
    %408 = vmatpush2.msra.mxu0 0.0
    %409 = vmatprep.subr.mxu0 0.0
    %410 = vmatpush2.msra.mxu0 0.0
    %411 = vmatprep.subr.mxu0 0.0
    %412 = vmatpush2.msra.mxu0 0.0
    %413 = vmatprep.subr.mxu0 0.0
    %414 = vmatpush2.msra.mxu0 0.0
    %415 = vmatprep.subr.mxu0 0.0
    %416 = vmatpush2.msra.mxu0 0.0
    %417 = vmatprep.subr.mxu0 0.0
    %418 = vmatpush2.msra.mxu0 0.0
    %419 = vmatprep.subr.mxu0 0.0
    %420 = vmatpush2.msra.mxu0 0.0
    %421 = vmatprep.subr.mxu0 0.0
    %422 = vmatpush2.msra.mxu0 0.0
    %423 = vmatprep.subr.mxu0 0.0
    %424 = vmatpush2.msra.mxu0 0.0
    %425 = vmatprep.subr.mxu0 0.0
    %426 = vmatpush2.msra.mxu0 0.0
    %427 = vmatprep.subr.mxu0 0.0
    %428 = vmatpush2.msra.mxu0 0.0
    %429 = vmatprep.subr.mxu0 0.0
    %430 = vmatpush2.msra.mxu0 0.0
    %431 = vmatprep.subr.mxu0 0.0
    %432 = vmatpush2.msra.mxu0 0.0
    %433 = vmatprep.mubr.f32.mxu0 0.0
    %434 = vmatmul.mubr.f32.gmra.mxu0 %v347
    %v435 = vpop.f32.mrf.mxu0
    %v436 = vadd.f32 %v368, %v435
    %v437 = vpop.f32.mrf.mxu0
    %438 = vdwg.mxu0
    %vm439 = vcmp.ge.f32.partialorder %v436, 0.0
    %v440 = vmul.f32 %v436, 0.2
    %v441 = vsel %vm439, %v436, %v440
    %s442 = scalar_lea.vmem [#allocation5], 384
    %v443 = vld [vmem:[%s442] sm:$0xff]
    %v444 = vld [vmem:[%s442 + $0x8] sm:$0xff]
    %v445 = vld [vmem:[%s442 + $0x10] sm:$0xff]
    %v446 = vld [vmem:[%s442 + $0x18] sm:$0xff]
    %v447 = vld [vmem:[%s442 + $0x20] sm:$0xff]
    %v448 = vld [vmem:[%s442 + $0x28] sm:$0xff]
    %v449 = vld [vmem:[%s442 + $0x30] sm:$0xff]
    %v450 = vld [vmem:[%s442 + $0x38] sm:$0xff]
    %v451 = vld [vmem:[%s442 + $0x40] sm:$0xff]
    %v452 = vld [vmem:[%s442 + $0x48] sm:$0xff]
    %v453 = vld [vmem:[%s442 + $0x50] sm:$0xff]
    %v454 = vld [vmem:[%s442 + $0x58] sm:$0xff]
    %v455 = vld [vmem:[%s442 + $0x60] sm:$0xff]
    %v456 = vld [vmem:[%s442 + $0x68] sm:$0xff]
    %v457 = vld [vmem:[%s442 + $0x70] sm:$0xff]
    %v458 = vld [vmem:[%s442 + $0x78] sm:$0xff]
    %v459 = vlaneseq
    %v460 = vshrl.u32 %v459, 7
    %v461 = vsub.s32 3, %v460
    %v462 = vrot.slane %v160, %v461
    %463 = vmatprep.subr.mxu0 0.0
    %464 = vmatpush1.msra.mxu0 %v458
    %465 = vmatprep.subr.mxu0 0.0
    %466 = vmatpush1.msra.mxu0 %v457
    %467 = vmatprep.subr.mxu0 0.0
    %468 = vmatpush1.msra.mxu0 %v456
    %469 = vmatprep.subr.mxu0 0.0
    %470 = vmatpush1.msra.mxu0 %v455
    %471 = vmatprep.subr.mxu0 0.0
    %472 = vmatpush1.msra.mxu0 %v454
    %473 = vmatprep.subr.mxu0 0.0
    %474 = vmatpush1.msra.mxu0 %v453
    %475 = vmatprep.subr.mxu0 0.0
    %476 = vmatpush1.msra.mxu0 %v452
    %477 = vmatprep.subr.mxu0 0.0
    %478 = vmatpush1.msra.mxu0 %v451
    %479 = vmatprep.subr.mxu0 0.0
    %480 = vmatpush1.msra.mxu0 %v450
    %481 = vmatprep.subr.mxu0 0.0
    %482 = vmatpush1.msra.mxu0 %v449
    %483 = vmatprep.subr.mxu0 0.0
    %484 = vmatpush1.msra.mxu0 %v448
    %485 = vmatprep.subr.mxu0 0.0
    %486 = vmatpush1.msra.mxu0 %v447
    %487 = vmatprep.subr.mxu0 0.0
    %488 = vmatpush1.msra.mxu0 %v446
    %489 = vmatprep.subr.mxu0 0.0
    %490 = vmatpush1.msra.mxu0 %v445
    %491 = vmatprep.subr.mxu0 0.0
    %492 = vmatpush1.msra.mxu0 %v444
    %493 = vmatprep.subr.mxu0 0.0
    %494 = vmatpush1.msra.mxu0 %v443
    %495 = vmatprep.subr.mxu0 0.0
    %496 = vmatpush2.msra.mxu0 0.0
    %497 = vmatprep.subr.mxu0 0.0
    %498 = vmatpush2.msra.mxu0 0.0
    %499 = vmatprep.subr.mxu0 0.0
    %500 = vmatpush2.msra.mxu0 0.0
    %501 = vmatprep.subr.mxu0 0.0
    %502 = vmatpush2.msra.mxu0 0.0
    %503 = vmatprep.subr.mxu0 0.0
    %504 = vmatpush2.msra.mxu0 0.0
    %505 = vmatprep.subr.mxu0 0.0
    %506 = vmatpush2.msra.mxu0 0.0
    %507 = vmatprep.subr.mxu0 0.0
    %508 = vmatpush2.msra.mxu0 0.0
    %509 = vmatprep.subr.mxu0 0.0
    %510 = vmatpush2.msra.mxu0 0.0
    %511 = vmatprep.subr.mxu0 0.0
    %512 = vmatpush2.msra.mxu0 0.0
    %513 = vmatprep.subr.mxu0 0.0
    %514 = vmatpush2.msra.mxu0 0.0
    %515 = vmatprep.subr.mxu0 0.0
    %516 = vmatpush2.msra.mxu0 0.0
    %517 = vmatprep.subr.mxu0 0.0
    %518 = vmatpush2.msra.mxu0 0.0
    %519 = vmatprep.subr.mxu0 0.0
    %520 = vmatpush2.msra.mxu0 0.0
    %521 = vmatprep.subr.mxu0 0.0
    %522 = vmatpush2.msra.mxu0 0.0
    %523 = vmatprep.subr.mxu0 0.0
    %524 = vmatpush2.msra.mxu0 0.0
    %525 = vmatprep.subr.mxu0 0.0
    %526 = vmatpush2.msra.mxu0 0.0
    %527 = vmatprep.mubr.f32.mxu0 0.0
    %528 = vmatmul.mubr.f32.gmra.mxu0 %v441
    %v529 = vpop.f32.mrf.mxu0
    %v530 = vadd.f32 %v462, %v529
    %v531 = vpop.f32.mrf.mxu0
    %532 = vdwg.mxu0
    %vm533 = vcmp.ge.f32.partialorder %v530, 0.0
    %v534 = vmul.f32 %v530, 0.2
    %v535 = vsel %vm533, %v530, %v534
    %s536 = scalar_lea.vmem [#allocation5], 512
    %v537 = vld [vmem:[%s536] sm:$0xff]
    %v538 = vld [vmem:[%s536 + $0x8] sm:$0xff]
    %v539 = vld [vmem:[%s536 + $0x10] sm:$0xff]
    %v540 = vld [vmem:[%s536 + $0x18] sm:$0xff]
    %v541 = vld [vmem:[%s536 + $0x20] sm:$0xff]
    %v542 = vld [vmem:[%s536 + $0x28] sm:$0xff]
    %v543 = vld [vmem:[%s536 + $0x30] sm:$0xff]
    %v544 = vld [vmem:[%s536 + $0x38] sm:$0xff]
    %v545 = vld [vmem:[%s536 + $0x40] sm:$0xff]
    %v546 = vld [vmem:[%s536 + $0x48] sm:$0xff]
    %v547 = vld [vmem:[%s536 + $0x50] sm:$0xff]
    %v548 = vld [vmem:[%s536 + $0x58] sm:$0xff]
    %v549 = vld [vmem:[%s536 + $0x60] sm:$0xff]
    %v550 = vld [vmem:[%s536 + $0x68] sm:$0xff]
    %v551 = vld [vmem:[%s536 + $0x70] sm:$0xff]
    %v552 = vld [vmem:[%s536 + $0x78] sm:$0xff]
    %v553 = vlaneseq
    %v554 = vshrl.u32 %v553, 7
    %v555 = vsub.s32 4, %v554
    %v556 = vrot.slane %v160, %v555
    %557 = vmatprep.subr.mxu0 0.0
    %558 = vmatpush1.msra.mxu0 %v552
    %559 = vmatprep.subr.mxu0 0.0
    %560 = vmatpush1.msra.mxu0 %v551
    %561 = vmatprep.subr.mxu0 0.0
    %562 = vmatpush1.msra.mxu0 %v550
    %563 = vmatprep.subr.mxu0 0.0
    %564 = vmatpush1.msra.mxu0 %v549
    %565 = vmatprep.subr.mxu0 0.0
    %566 = vmatpush1.msra.mxu0 %v548
    %567 = vmatprep.subr.mxu0 0.0
    %568 = vmatpush1.msra.mxu0 %v547
    %569 = vmatprep.subr.mxu0 0.0
    %570 = vmatpush1.msra.mxu0 %v546
    %571 = vmatprep.subr.mxu0 0.0
    %572 = vmatpush1.msra.mxu0 %v545
    %573 = vmatprep.subr.mxu0 0.0
    %574 = vmatpush1.msra.mxu0 %v544
    %575 = vmatprep.subr.mxu0 0.0
    %576 = vmatpush1.msra.mxu0 %v543
    %577 = vmatprep.subr.mxu0 0.0
    %578 = vmatpush1.msra.mxu0 %v542
    %579 = vmatprep.subr.mxu0 0.0
    %580 = vmatpush1.msra.mxu0 %v541
    %581 = vmatprep.subr.mxu0 0.0
    %582 = vmatpush1.msra.mxu0 %v540
    %583 = vmatprep.subr.mxu0 0.0
    %584 = vmatpush1.msra.mxu0 %v539
    %585 = vmatprep.subr.mxu0 0.0
    %586 = vmatpush1.msra.mxu0 %v538
    %587 = vmatprep.subr.mxu0 0.0
    %588 = vmatpush1.msra.mxu0 %v537
    %589 = vmatprep.subr.mxu0 0.0
    %590 = vmatpush2.msra.mxu0 0.0
    %591 = vmatprep.subr.mxu0 0.0
    %592 = vmatpush2.msra.mxu0 0.0
    %593 = vmatprep.subr.mxu0 0.0
    %594 = vmatpush2.msra.mxu0 0.0
    %595 = vmatprep.subr.mxu0 0.0
    %596 = vmatpush2.msra.mxu0 0.0
    %597 = vmatprep.subr.mxu0 0.0
    %598 = vmatpush2.msra.mxu0 0.0
    %599 = vmatprep.subr.mxu0 0.0
    %600 = vmatpush2.msra.mxu0 0.0
    %601 = vmatprep.subr.mxu0 0.0
    %602 = vmatpush2.msra.mxu0 0.0
    %603 = vmatprep.subr.mxu0 0.0
    %604 = vmatpush2.msra.mxu0 0.0
    %605 = vmatprep.subr.mxu0 0.0
    %606 = vmatpush2.msra.mxu0 0.0
    %607 = vmatprep.subr.mxu0 0.0
    %608 = vmatpush2.msra.mxu0 0.0
    %609 = vmatprep.subr.mxu0 0.0
    %610 = vmatpush2.msra.mxu0 0.0
    %611 = vmatprep.subr.mxu0 0.0
    %612 = vmatpush2.msra.mxu0 0.0
    %613 = vmatprep.subr.mxu0 0.0
    %614 = vmatpush2.msra.mxu0 0.0
    %615 = vmatprep.subr.mxu0 0.0
    %616 = vmatpush2.msra.mxu0 0.0
    %617 = vmatprep.subr.mxu0 0.0
    %618 = vmatpush2.msra.mxu0 0.0
    %619 = vmatprep.subr.mxu0 0.0
    %620 = vmatpush2.msra.mxu0 0.0
    %621 = vmatprep.mubr.f32.mxu0 0.0
    %622 = vmatmul.mubr.f32.gmra.mxu0 %v535
    %v623 = vpop.f32.mrf.mxu0
    %v624 = vadd.f32 %v556, %v623
    %v625 = vpop.f32.mrf.mxu0
    %626 = vdwg.mxu0
    %vm627 = vcmp.ge.f32.partialorder %v624, 0.0
    %v628 = vmul.f32 %v624, 0.2
    %v629 = vsel %vm627, %v624, %v628
    %s630 = scalar_lea.vmem [#allocation5], 640
    %v631 = vld [vmem:[%s630] sm:$0xff]
    %v632 = vld [vmem:[%s630 + $0x8] sm:$0xff]
    %v633 = vld [vmem:[%s630 + $0x10] sm:$0xff]
    %v634 = vld [vmem:[%s630 + $0x18] sm:$0xff]
    %v635 = vld [vmem:[%s630 + $0x20] sm:$0xff]
    %v636 = vld [vmem:[%s630 + $0x28] sm:$0xff]
    %v637 = vld [vmem:[%s630 + $0x30] sm:$0xff]
    %v638 = vld [vmem:[%s630 + $0x38] sm:$0xff]
    %v639 = vld [vmem:[%s630 + $0x40] sm:$0xff]
    %v640 = vld [vmem:[%s630 + $0x48] sm:$0xff]
    %v641 = vld [vmem:[%s630 + $0x50] sm:$0xff]
    %v642 = vld [vmem:[%s630 + $0x58] sm:$0xff]
    %v643 = vld [vmem:[%s630 + $0x60] sm:$0xff]
    %v644 = vld [vmem:[%s630 + $0x68] sm:$0xff]
    %v645 = vld [vmem:[%s630 + $0x70] sm:$0xff]
    %v646 = vld [vmem:[%s630 + $0x78] sm:$0xff]
    %v647 = vlaneseq
    %v648 = vshrl.u32 %v647, 7
    %v649 = vsub.s32 5, %v648
    %v650 = vrot.slane %v160, %v649
    %651 = vmatprep.subr.mxu0 0.0
    %652 = vmatpush1.msra.mxu0 %v646
    %653 = vmatprep.subr.mxu0 0.0
    %654 = vmatpush1.msra.mxu0 %v645
    %655 = vmatprep.subr.mxu0 0.0
    %656 = vmatpush1.msra.mxu0 %v644
    %657 = vmatprep.subr.mxu0 0.0
    %658 = vmatpush1.msra.mxu0 %v643
    %659 = vmatprep.subr.mxu0 0.0
    %660 = vmatpush1.msra.mxu0 %v642
    %661 = vmatprep.subr.mxu0 0.0
    %662 = vmatpush1.msra.mxu0 %v641
    %663 = vmatprep.subr.mxu0 0.0
    %664 = vmatpush1.msra.mxu0 %v640
    %665 = vmatprep.subr.mxu0 0.0
    %666 = vmatpush1.msra.mxu0 %v639
    %667 = vmatprep.subr.mxu0 0.0
    %668 = vmatpush1.msra.mxu0 %v638
    %669 = vmatprep.subr.mxu0 0.0
    %670 = vmatpush1.msra.mxu0 %v637
    %671 = vmatprep.subr.mxu0 0.0
    %672 = vmatpush1.msra.mxu0 %v636
    %673 = vmatprep.subr.mxu0 0.0
    %674 = vmatpush1.msra.mxu0 %v635
    %675 = vmatprep.subr.mxu0 0.0
    %676 = vmatpush1.msra.mxu0 %v634
    %677 = vmatprep.subr.mxu0 0.0
    %678 = vmatpush1.msra.mxu0 %v633
    %679 = vmatprep.subr.mxu0 0.0
    %680 = vmatpush1.msra.mxu0 %v632
    %681 = vmatprep.subr.mxu0 0.0
    %682 = vmatpush1.msra.mxu0 %v631
    %683 = vmatprep.subr.mxu0 0.0
    %684 = vmatpush2.msra.mxu0 0.0
    %685 = vmatprep.subr.mxu0 0.0
    %686 = vmatpush2.msra.mxu0 0.0
    %687 = vmatprep.subr.mxu0 0.0
    %688 = vmatpush2.msra.mxu0 0.0
    %689 = vmatprep.subr.mxu0 0.0
    %690 = vmatpush2.msra.mxu0 0.0
    %691 = vmatprep.subr.mxu0 0.0
    %692 = vmatpush2.msra.mxu0 0.0
    %693 = vmatprep.subr.mxu0 0.0
    %694 = vmatpush2.msra.mxu0 0.0
    %695 = vmatprep.subr.mxu0 0.0
    %696 = vmatpush2.msra.mxu0 0.0
    %697 = vmatprep.subr.mxu0 0.0
    %698 = vmatpush2.msra.mxu0 0.0
    %699 = vmatprep.subr.mxu0 0.0
    %700 = vmatpush2.msra.mxu0 0.0
    %701 = vmatprep.subr.mxu0 0.0
    %702 = vmatpush2.msra.mxu0 0.0
    %703 = vmatprep.subr.mxu0 0.0
    %704 = vmatpush2.msra.mxu0 0.0
    %705 = vmatprep.subr.mxu0 0.0
    %706 = vmatpush2.msra.mxu0 0.0
    %707 = vmatprep.subr.mxu0 0.0
    %708 = vmatpush2.msra.mxu0 0.0
    %709 = vmatprep.subr.mxu0 0.0
    %710 = vmatpush2.msra.mxu0 0.0
    %711 = vmatprep.subr.mxu0 0.0
    %712 = vmatpush2.msra.mxu0 0.0
    %713 = vmatprep.subr.mxu0 0.0
    %714 = vmatpush2.msra.mxu0 0.0
    %715 = vmatprep.mubr.f32.mxu0 0.0
    %716 = vmatmul.mubr.f32.gmra.mxu0 %v629
    %v717 = vpop.f32.mrf.mxu0
    %v718 = vadd.f32 %v650, %v717
    %v719 = vpop.f32.mrf.mxu0
    %720 = vdwg.mxu0
    %vm721 = vcmp.ge.f32.partialorder %v718, 0.0
    %v722 = vmul.f32 %v718, 0.2
    %v723 = vsel %vm721, %v718, %v722
    %s724 = scalar_lea.vmem [#allocation5], 768
    %v725 = vld [vmem:[%s724] sm:$0xff]
    %v726 = vld [vmem:[%s724 + $0x8] sm:$0xff]
    %v727 = vld [vmem:[%s724 + $0x10] sm:$0xff]
    %v728 = vld [vmem:[%s724 + $0x18] sm:$0xff]
    %v729 = vld [vmem:[%s724 + $0x20] sm:$0xff]
    %v730 = vld [vmem:[%s724 + $0x28] sm:$0xff]
    %v731 = vld [vmem:[%s724 + $0x30] sm:$0xff]
    %v732 = vld [vmem:[%s724 + $0x38] sm:$0xff]
    %v733 = vld [vmem:[%s724 + $0x40] sm:$0xff]
    %v734 = vld [vmem:[%s724 + $0x48] sm:$0xff]
    %v735 = vld [vmem:[%s724 + $0x50] sm:$0xff]
    %v736 = vld [vmem:[%s724 + $0x58] sm:$0xff]
    %v737 = vld [vmem:[%s724 + $0x60] sm:$0xff]
    %v738 = vld [vmem:[%s724 + $0x68] sm:$0xff]
    %v739 = vld [vmem:[%s724 + $0x70] sm:$0xff]
    %v740 = vld [vmem:[%s724 + $0x78] sm:$0xff]
    %v741 = vlaneseq
    %v742 = vshrl.u32 %v741, 7
    %v743 = vsub.s32 6, %v742
    %v744 = vrot.slane %v160, %v743
    %745 = vmatprep.subr.mxu0 0.0
    %746 = vmatpush1.msra.mxu0 %v740
    %747 = vmatprep.subr.mxu0 0.0
    %748 = vmatpush1.msra.mxu0 %v739
    %749 = vmatprep.subr.mxu0 0.0
    %750 = vmatpush1.msra.mxu0 %v738
    %751 = vmatprep.subr.mxu0 0.0
    %752 = vmatpush1.msra.mxu0 %v737
    %753 = vmatprep.subr.mxu0 0.0
    %754 = vmatpush1.msra.mxu0 %v736
    %755 = vmatprep.subr.mxu0 0.0
    %756 = vmatpush1.msra.mxu0 %v735
    %757 = vmatprep.subr.mxu0 0.0
    %758 = vmatpush1.msra.mxu0 %v734
    %759 = vmatprep.subr.mxu0 0.0
    %760 = vmatpush1.msra.mxu0 %v733
    %761 = vmatprep.subr.mxu0 0.0
    %762 = vmatpush1.msra.mxu0 %v732
    %763 = vmatprep.subr.mxu0 0.0
    %764 = vmatpush1.msra.mxu0 %v731
    %765 = vmatprep.subr.mxu0 0.0
    %766 = vmatpush1.msra.mxu0 %v730
    %767 = vmatprep.subr.mxu0 0.0
    %768 = vmatpush1.msra.mxu0 %v729
    %769 = vmatprep.subr.mxu0 0.0
    %770 = vmatpush1.msra.mxu0 %v728
    %771 = vmatprep.subr.mxu0 0.0
    %772 = vmatpush1.msra.mxu0 %v727
    %773 = vmatprep.subr.mxu0 0.0
    %774 = vmatpush1.msra.mxu0 %v726
    %775 = vmatprep.subr.mxu0 0.0
    %776 = vmatpush1.msra.mxu0 %v725
    %777 = vmatprep.subr.mxu0 0.0
    %778 = vmatpush2.msra.mxu0 0.0
    %779 = vmatprep.subr.mxu0 0.0
    %780 = vmatpush2.msra.mxu0 0.0
    %781 = vmatprep.subr.mxu0 0.0
    %782 = vmatpush2.msra.mxu0 0.0
    %783 = vmatprep.subr.mxu0 0.0
    %784 = vmatpush2.msra.mxu0 0.0
    %785 = vmatprep.subr.mxu0 0.0
    %786 = vmatpush2.msra.mxu0 0.0
    %787 = vmatprep.subr.mxu0 0.0
    %788 = vmatpush2.msra.mxu0 0.0
    %789 = vmatprep.subr.mxu0 0.0
    %790 = vmatpush2.msra.mxu0 0.0
    %791 = vmatprep.subr.mxu0 0.0
    %792 = vmatpush2.msra.mxu0 0.0
    %793 = vmatprep.subr.mxu0 0.0
    %794 = vmatpush2.msra.mxu0 0.0
    %795 = vmatprep.subr.mxu0 0.0
    %796 = vmatpush2.msra.mxu0 0.0
    %797 = vmatprep.subr.mxu0 0.0
    %798 = vmatpush2.msra.mxu0 0.0
    %799 = vmatprep.subr.mxu0 0.0
    %800 = vmatpush2.msra.mxu0 0.0
    %801 = vmatprep.subr.mxu0 0.0
    %802 = vmatpush2.msra.mxu0 0.0
    %803 = vmatprep.subr.mxu0 0.0
    %804 = vmatpush2.msra.mxu0 0.0
    %805 = vmatprep.subr.mxu0 0.0
    %806 = vmatpush2.msra.mxu0 0.0
    %807 = vmatprep.subr.mxu0 0.0
    %808 = vmatpush2.msra.mxu0 0.0
    %809 = vmatprep.mubr.f32.mxu0 0.0
    %810 = vmatmul.mubr.f32.gmra.mxu0 %v723
    %v811 = vpop.f32.mrf.mxu0
    %v812 = vadd.f32 %v744, %v811
    %v813 = vpop.f32.mrf.mxu0
    %814 = vdwg.mxu0
    %vm815 = vcmp.ge.f32.partialorder %v812, 0.0
    %v816 = vmul.f32 %v812, 0.2
    %v817 = vsel %vm815, %v812, %v816
    %s818 = scalar_lea.vmem [#allocation5], 896
    %v819 = vld [vmem:[%s818] sm:$0xff]
    %v820 = vld [vmem:[%s818 + $0x8] sm:$0xff]
    %v821 = vld [vmem:[%s818 + $0x10] sm:$0xff]
    %v822 = vld [vmem:[%s818 + $0x18] sm:$0xff]
    %v823 = vld [vmem:[%s818 + $0x20] sm:$0xff]
    %v824 = vld [vmem:[%s818 + $0x28] sm:$0xff]
    %v825 = vld [vmem:[%s818 + $0x30] sm:$0xff]
    %v826 = vld [vmem:[%s818 + $0x38] sm:$0xff]
    %v827 = vld [vmem:[%s818 + $0x40] sm:$0xff]
    %v828 = vld [vmem:[%s818 + $0x48] sm:$0xff]
    %v829 = vld [vmem:[%s818 + $0x50] sm:$0xff]
    %v830 = vld [vmem:[%s818 + $0x58] sm:$0xff]
    %v831 = vld [vmem:[%s818 + $0x60] sm:$0xff]
    %v832 = vld [vmem:[%s818 + $0x68] sm:$0xff]
    %v833 = vld [vmem:[%s818 + $0x70] sm:$0xff]
    %v834 = vld [vmem:[%s818 + $0x78] sm:$0xff]
    %v835 = vlaneseq
    %v836 = vshrl.u32 %v835, 7
    %v837 = vsub.s32 7, %v836
    %v838 = vrot.slane %v160, %v837
    %839 = vmatprep.subr.mxu0 0.0
    %840 = vmatpush1.msra.mxu0 %v834
    %841 = vmatprep.subr.mxu0 0.0
    %842 = vmatpush1.msra.mxu0 %v833
    %843 = vmatprep.subr.mxu0 0.0
    %844 = vmatpush1.msra.mxu0 %v832
    %845 = vmatprep.subr.mxu0 0.0
    %846 = vmatpush1.msra.mxu0 %v831
    %847 = vmatprep.subr.mxu0 0.0
    %848 = vmatpush1.msra.mxu0 %v830
    %849 = vmatprep.subr.mxu0 0.0
    %850 = vmatpush1.msra.mxu0 %v829
    %851 = vmatprep.subr.mxu0 0.0
    %852 = vmatpush1.msra.mxu0 %v828
    %853 = vmatprep.subr.mxu0 0.0
    %854 = vmatpush1.msra.mxu0 %v827
    %855 = vmatprep.subr.mxu0 0.0
    %856 = vmatpush1.msra.mxu0 %v826
    %857 = vmatprep.subr.mxu0 0.0
    %858 = vmatpush1.msra.mxu0 %v825
    %859 = vmatprep.subr.mxu0 0.0
    %860 = vmatpush1.msra.mxu0 %v824
    %861 = vmatprep.subr.mxu0 0.0
    %862 = vmatpush1.msra.mxu0 %v823
    %863 = vmatprep.subr.mxu0 0.0
    %864 = vmatpush1.msra.mxu0 %v822
    %865 = vmatprep.subr.mxu0 0.0
    %866 = vmatpush1.msra.mxu0 %v821
    %867 = vmatprep.subr.mxu0 0.0
    %868 = vmatpush1.msra.mxu0 %v820
    %869 = vmatprep.subr.mxu0 0.0
    %870 = vmatpush1.msra.mxu0 %v819
    %871 = vmatprep.subr.mxu0 0.0
    %872 = vmatpush2.msra.mxu0 0.0
    %873 = vmatprep.subr.mxu0 0.0
    %874 = vmatpush2.msra.mxu0 0.0
    %875 = vmatprep.subr.mxu0 0.0
    %876 = vmatpush2.msra.mxu0 0.0
    %877 = vmatprep.subr.mxu0 0.0
    %878 = vmatpush2.msra.mxu0 0.0
    %879 = vmatprep.subr.mxu0 0.0
    %880 = vmatpush2.msra.mxu0 0.0
    %881 = vmatprep.subr.mxu0 0.0
    %882 = vmatpush2.msra.mxu0 0.0
    %883 = vmatprep.subr.mxu0 0.0
    %884 = vmatpush2.msra.mxu0 0.0
    %885 = vmatprep.subr.mxu0 0.0
    %886 = vmatpush2.msra.mxu0 0.0
    %887 = vmatprep.subr.mxu0 0.0
    %888 = vmatpush2.msra.mxu0 0.0
    %889 = vmatprep.subr.mxu0 0.0
    %890 = vmatpush2.msra.mxu0 0.0
    %891 = vmatprep.subr.mxu0 0.0
    %892 = vmatpush2.msra.mxu0 0.0
    %893 = vmatprep.subr.mxu0 0.0
    %894 = vmatpush2.msra.mxu0 0.0
    %895 = vmatprep.subr.mxu0 0.0
    %896 = vmatpush2.msra.mxu0 0.0
    %897 = vmatprep.subr.mxu0 0.0
    %898 = vmatpush2.msra.mxu0 0.0
    %899 = vmatprep.subr.mxu0 0.0
    %900 = vmatpush2.msra.mxu0 0.0
    %901 = vmatprep.subr.mxu0 0.0
    %902 = vmatpush2.msra.mxu0 0.0
    %903 = vmatprep.mubr.f32.mxu0 0.0
    %904 = vmatmul.mubr.f32.gmra.mxu0 %v817
    %v905 = vpop.f32.mrf.mxu0
    %v906 = vadd.f32 %v838, %v905
    %v907 = vpop.f32.mrf.mxu0
    %908 = vdwg.mxu0
    %vm909 = vcmp.ge.f32.partialorder %v906, 0.0
    %v910 = vmul.f32 %v906, 0.2
    %v911 = vsel %vm909, %v906, %v910
    %912 = vst [vmem:[#allocation10] sm:$0xff] %v911
    // Predicated region
    $region34: #{tpu_custom_call.1} parent=1 // pred_check
      _
    $region35: #{tpu_custom_call.1} parent=1 // pred_check_branch
      %914 = sbr.rel (0) target = $region37
    $region36: #{tpu_custom_call.1} parent=1 // pred_region
      %s916 = ssub.s32 128, 128
      %917 = vsyncadd [#allocation4], %s916
      %s919 = sshll.u32 [#allocation10], 4
      %s920 = int_to_ptr.vmem [resolvable:$true] %s919
      %922 = dma.vmem_to_hbm [thread:$0]  %s920, 128, %s4, [#allocation4]
    $region37: #{tpu_custom_call.1} parent=1 // pred_fallthru
      _
    // Predicated region
    $region38: #{tpu_custom_call.1} parent=1 // pred_check
      _
    $region39: #{tpu_custom_call.1} parent=1 // pred_check_branch
      %924 = sbr.rel (0) target = $region41
    $region40: #{tpu_custom_call.1} parent=1 // pred_region
      %925 = dma.done [#allocation4], 128
    $region41: #{tpu_custom_call.1} parent=1 // pred_fallthru
      _
    %926 = vsyncpa [#allocation3], 1
    %927 = vsyncpa [#allocation6], 1
    %928 = vsyncpa [#allocation9], 1
    %929 = vsyncpa [#allocation4], 1

</llo_original>
